<compile_context>
chip_gen: v6e
topology: v6e:2x2x1
jax: 0.10.0
libtpu: 0.0.40
codegen_flags: <defaults>
</compile_context>

<pallas_src>
import jax
import jax.numpy as jnp
from jax import lax
from jax.experimental import pallas as pl
from jax.experimental.pallas import tpu as pltpu


def mlp_head_kernel(x_ref, wa_ref, ba_ref, wb_ref, bb_ref, wc_ref, bc_ref,
                    seg_ref, o_ref):
    """Fused 3x(Linear[+ReLU]) + per-row L2 norm, on a batch-folded tile.

    x_ref:  (tile_f, F*dim)   f32   -- F batch rows folded per lane-row
    w*_ref: block-diagonal folded weights (bf16), b*_ref: tiled biases (f32)
    seg_ref:(F*out, F*out)    f32   -- kron(I_F, ones(out,out)) segment mask
    o_ref:  (tile_f, F*out)   f32   -- 128-lane dense output
    """
    # f32 read from HBM, bf16 cast in VMEM (VPU cast is free filler here).
    x = x_ref[...].astype(jnp.bfloat16)

    h = jnp.dot(x, wa_ref[...], preferred_element_type=jnp.float32) + ba_ref[...]
    h = jnp.maximum(h, 0.0)

    h = jnp.dot(h.astype(jnp.bfloat16), wb_ref[...],
                preferred_element_type=jnp.float32) + bb_ref[...]
    h = jnp.maximum(h, 0.0)

    y = jnp.dot(h.astype(jnp.bfloat16), wc_ref[...],
                preferred_element_type=jnp.float32) + bc_ref[...]

    # Per-16-lane-segment squared norm, broadcast back to every lane of the
    # segment, via a single f32 matmul against the block mask.
    sq = jnp.dot(y * y, seg_ref[...], preferred_element_type=jnp.float32)

    # torch.nn.functional.normalize(y, p=2, dim=-1): y / max(||y||, 1e-12).
    inv = lax.rsqrt(jnp.maximum(sq, 1e-24))            # EUP rsqrt (free slot)
    o_ref[...] = (y * inv).astype(o_ref.dtype)


def mlp_head(x, params, *, max_tile_rows=8192):
    """x: (B, dim) float32. Returns (B, out_dim) float32 with L2-normalized rows."""
    wa, ba, wb, bb, wc, bc = params
    B, dim = x.shape
    mid = wa.shape[1]
    out_dim = wc.shape[1]

    # Fold F batch rows per lane-row so the output width is exactly 128 lanes.
    F = 128 // out_dim if (out_dim <= 128 and 128 % out_dim == 0) else 1

    B_pad = ((B + F - 1) // F) * F
    if B_pad != B:
        # Explicit zero padding so a folded lane-row never mixes valid rows
        # with stale garbage.  TODO(synk): have the producer emit a
        # multiple-of-F batch so this copy disappears.
        x = jnp.pad(x, ((0, B_pad - B), (0, 0)))
    rows_f = B_pad // F
    x_f = x.reshape(rows_f, F * dim)          # free: contiguous row-major fold

    # Block-diagonal folded weights / tiled biases (tiny, built once per call;
    # weight-side preprocessing is irrelevant at 32x32).
    eye_f = jnp.eye(F, dtype=jnp.float32)
    wa_bd = jnp.kron(eye_f, wa).astype(jnp.bfloat16)        # (F*dim, F*mid)
    wb_bd = jnp.kron(eye_f, wb).astype(jnp.bfloat16)        # (F*mid, F*mid)
    wc_bd = jnp.kron(eye_f, wc).astype(jnp.bfloat16)        # (F*mid, F*out)
    ba_t = jnp.tile(ba, (1, F))                              # (1, F*mid)
    bb_t = jnp.tile(bb, (1, F))                              # (1, F*mid)
    bc_t = jnp.tile(bc, (1, F))                              # (1, F*out)
    seg = jnp.kron(eye_f, jnp.ones((out_dim, out_dim), jnp.float32))

    # Batch tiling (in folded rows).  Big tiles amortize the ~0.35 us per-step
    # overhead; >=2 steps when the batch is big enough so the "parallel" axis
    # actually feeds both v7x TensorCores.
    max_tile_f = max(8, (max_tile_rows // F // 8) * 8)       # 1024 -> 8192 rows
    if rows_f <= 16:
        tile_f = rows_f            # tiny batch: single step (see TODO below)
    else:
        half = -(-rows_f // 2)                               # ceil(rows_f / 2)
        tile_f = min(max_tile_f, ((half + 7) // 8) * 8)
    grid = (pl.cdiv(rows_f, tile_f),)

    row_map = lambda i: (i, 0)     # x / out: walk the folded batch axis
    const_map = lambda i: (0, 0)   # weights / biases / mask: VMEM-resident

    in_specs = [
        pl.BlockSpec((tile_f, F * dim), row_map),
        pl.BlockSpec((F * dim, F * mid), const_map),
        pl.BlockSpec((1, F * mid), const_map),
        pl.BlockSpec((F * mid, F * mid), const_map),
        pl.BlockSpec((1, F * mid), const_map),
        pl.BlockSpec((F * mid, F * out_dim), const_map),
        pl.BlockSpec((1, F * out_dim), const_map),
        pl.BlockSpec((F * out_dim, F * out_dim), const_map),
    ]
    out_specs = pl.BlockSpec((tile_f, F * out_dim), row_map)

    # Advisory cost hint (logical FLOPs, not the zero-padded block-diag ones).
    flops = 2 * B_pad * (dim * mid + mid * mid + mid * out_dim)
    bytes_accessed = (
        x_f.size * 4 + rows_f * F * out_dim * 4
        + (wa_bd.size + wb_bd.size + wc_bd.size) * 2
        + (ba_t.size + bb_t.size + bc_t.size + seg.size) * 4)

    # TODO(synk): for tiny B (e.g. 8) launch overhead dominates; this head
    # should be fused into the kernel that produces x in production.
    out_f = pl.pallas_call(
        mlp_head_kernel,
        out_shape=jax.ShapeDtypeStruct((rows_f, F * out_dim), jnp.float32),
        grid=grid,
        in_specs=in_specs,
        out_specs=out_specs,
        compiler_params=pltpu.CompilerParams(
            dimension_semantics=("parallel",)),   # v7x: shard batch over 2 TCs
        cost_estimate=pl.CostEstimate(
            flops=flops, transcendentals=B_pad, bytes_accessed=bytes_accessed),
    )(x_f, wa_bd, ba_t, wb_bd, bb_t, wc_bd, bc_t, seg)

    out = out_f.reshape(B_pad, out_dim)          # free unfold
    return out[:B] if B_pad != B else out


def init_params(key, dim, mid_dim, out_dim):
    """Mimics nn.Linear default init (uniform +/- 1/sqrt(fan_in)).
    Weights are (in, out) — transposed relative to PyTorch's (out, in)."""
    ks = jax.random.split(key, 6)

    def lin(kw, kb, fan_in, fan_out):
        bound = 1.0 / jnp.sqrt(fan_in)
        w = jax.random.uniform(kw, (fan_in, fan_out), jnp.float32, -bound, bound)
        b = jax.random.uniform(kb, (1, fan_out), jnp.float32, -bound, bound)
        return w, b

    wa, ba = lin(ks[0], ks[1], dim, mid_dim)
    wb, bb = lin(ks[2], ks[3], mid_dim, mid_dim)
    wc, bc = lin(ks[4], ks[5], mid_dim, out_dim)
    return wa, ba, wb, bb, wc, bc


def _ref_forward_bf16(x, params):
    """Pure-JAX reference with the same bf16 quantization as the kernel."""
    wa, ba, wb, bb, wc, bc = params
    xb = x.astype(jnp.bfloat16)
    h = jnp.dot(xb, wa.astype(jnp.bfloat16),
                preferred_element_type=jnp.float32) + ba
    h = jnp.maximum(h, 0.0)
    h = jnp.dot(h.astype(jnp.bfloat16), wb.astype(jnp.bfloat16),
                preferred_element_type=jnp.float32) + bb
    h = jnp.maximum(h, 0.0)
    y = jnp.dot(h.astype(jnp.bfloat16), wc.astype(jnp.bfloat16),
                preferred_element_type=jnp.float32) + bc
    return y / jnp.maximum(jnp.linalg.norm(y, axis=-1, keepdims=True), 1e-12)


def _ref_forward_f32(x, params):
    """fp32 reference matching the original PyTorch module exactly."""
    wa, ba, wb, bb, wc, bc = params
    h = jnp.maximum(x @ wa + ba, 0.0)
    h = jnp.maximum(h @ wb + bb, 0.0)
    y = h @ wc + bc
    return y / jnp.maximum(jnp.linalg.norm(y, axis=-1, keepdims=True), 1e-12)


def _check(out, x, params):
    ref_b = _ref_forward_bf16(x, params)
    ref_f = _ref_forward_f32(x, params)
    assert out.shape == ref_f.shape
    assert jnp.allclose(out, ref_b, atol=1e-4, rtol=1e-4), float(
        jnp.max(jnp.abs(out - ref_b)))
    assert jnp.allclose(out, ref_f, atol=5e-2, rtol=5e-2), float(
        jnp.max(jnp.abs(out - ref_f)))


if __name__ == "__main__":
    DIM, MID, OUT = 32, 32, 16
    key = jax.random.PRNGKey(0)
    kx1, kx2, kx3, kp = jax.random.split(key, 4)
    params = init_params(kp, DIM, MID, OUT)

    # Small 2D case (the module's (B,1,1,1,dim) reshape + view(B,-1) is an
    # identity for 2-D inputs, so we operate directly on (B, dim)).
    x1 = jax.random.normal(kx1, (8, DIM), jnp.float32)
    out1 = jax.block_until_ready(mlp_head(x1, params))
    _check(out1, x1, params)

    # Multi-step grid: 200 rows -> 25 folded rows -> 16-row tiles -> 2 steps
    # (exercises resident weights + the masked partial last block).
    x2 = jax.random.normal(kx2, (200, DIM), jnp.float32)
    out2 = jax.block_until_ready(mlp_head(x2, params))
    _check(out2, x2, params)

    # Batch not a multiple of the fold factor (exercises the explicit pad path).
    x3 = jax.random.normal(kx3, (13, DIM), jnp.float32)
    out3 = jax.block_until_ready(mlp_head(x3, params))
    _check(out3, x3, params)

    print("KERNEL_OK")
</pallas_src>

<mosaic_0001>
module attributes {stable_mosaic.version = 11 : i64} {
  func.func @mlp_head_kernel(%arg0: i32, %arg1: memref<1x256xf32, #tpu.memory_space<vmem>>, %arg2: memref<256x256xbf16, #tpu.memory_space<vmem>>, %arg3: memref<1x256xf32, #tpu.memory_space<vmem>>, %arg4: memref<256x256xbf16, #tpu.memory_space<vmem>>, %arg5: memref<1x256xf32, #tpu.memory_space<vmem>>, %arg6: memref<256x128xbf16, #tpu.memory_space<vmem>>, %arg7: memref<1x128xf32, #tpu.memory_space<vmem>>, %arg8: memref<128x128xf32, #tpu.memory_space<vmem>>, %arg9: memref<1x128xf32, #tpu.memory_space<vmem>>) attributes {dimension_semantics = [#tpu.dimension_semantics<parallel>], iteration_bounds = array<i64: 1>, scalar_prefetch = 0 : i64, scratch_operands = 0 : i64, tpu.core_type = #tpu.core_type<tc>, window_params = [{transform_indices = @transform_0, window_bounds = array<i64: 1, 256>}, {pipeline_mode = #tpu.pipeline_mode<synchronous>, transform_indices = @transform_1, window_bounds = array<i64: 256, 256>}, {pipeline_mode = #tpu.pipeline_mode<synchronous>, transform_indices = @transform_2, window_bounds = array<i64: 1, 256>}, {pipeline_mode = #tpu.pipeline_mode<synchronous>, transform_indices = @transform_3, window_bounds = array<i64: 256, 256>}, {pipeline_mode = #tpu.pipeline_mode<synchronous>, transform_indices = @transform_4, window_bounds = array<i64: 1, 256>}, {pipeline_mode = #tpu.pipeline_mode<synchronous>, transform_indices = @transform_5, window_bounds = array<i64: 256, 128>}, {pipeline_mode = #tpu.pipeline_mode<synchronous>, transform_indices = @transform_6, window_bounds = array<i64: 1, 128>}, {pipeline_mode = #tpu.pipeline_mode<synchronous>, transform_indices = @transform_7, window_bounds = array<i64: 128, 128>}, {transform_indices = @transform_8, window_bounds = array<i64: 1, 128>}]} {
    %c0 = arith.constant 0 : index
    %c0_0 = arith.constant 0 : index
    %0 = vector.load %arg1[%c0, %c0_0] : memref<1x256xf32, #tpu.memory_space<vmem>>, vector<1x256xf32>
    %1 = arith.truncf %0 : vector<1x256xf32> to vector<1x256xbf16>
    %c0_1 = arith.constant 0 : index
    %c0_2 = arith.constant 0 : index
    %2 = vector.load %arg2[%c0_1, %c0_2] : memref<256x256xbf16, #tpu.memory_space<vmem>>, vector<256x256xbf16>
    %cst = arith.constant dense<0.000000e+00> : vector<1x256xf32>
    %3 = tpu.matmul %1, %2, %cst {dimension_numbers = #tpu.dot_dimension_numbers<[1], [0], [0], [1], [0, 0, 1, 1], [], []>} : vector<1x256xbf16>, vector<256x256xbf16>, vector<1x256xf32> -> vector<1x256xf32>
    %c0_3 = arith.constant 0 : index
    %c0_4 = arith.constant 0 : index
    %4 = vector.load %arg3[%c0_3, %c0_4] : memref<1x256xf32, #tpu.memory_space<vmem>>, vector<1x256xf32>
    %5 = arith.addf %3, %4 : vector<1x256xf32>
    %cst_5 = arith.constant 0.000000e+00 : f32
    %6 = vector.broadcast %cst_5 : f32 to vector<1x256xf32>
    %7 = arith.maximumf %5, %6 : vector<1x256xf32>
    %8 = arith.truncf %7 : vector<1x256xf32> to vector<1x256xbf16>
    %c0_6 = arith.constant 0 : index
    %c0_7 = arith.constant 0 : index
    %9 = vector.load %arg4[%c0_6, %c0_7] : memref<256x256xbf16, #tpu.memory_space<vmem>>, vector<256x256xbf16>
    %cst_8 = arith.constant dense<0.000000e+00> : vector<1x256xf32>
    %10 = tpu.matmul %8, %9, %cst_8 {dimension_numbers = #tpu.dot_dimension_numbers<[1], [0], [0], [1], [0, 0, 1, 1], [], []>} : vector<1x256xbf16>, vector<256x256xbf16>, vector<1x256xf32> -> vector<1x256xf32>
    %c0_9 = arith.constant 0 : index
    %c0_10 = arith.constant 0 : index
    %11 = vector.load %arg5[%c0_9, %c0_10] : memref<1x256xf32, #tpu.memory_space<vmem>>, vector<1x256xf32>
    %12 = arith.addf %10, %11 : vector<1x256xf32>
    %cst_11 = arith.constant 0.000000e+00 : f32
    %13 = vector.broadcast %cst_11 : f32 to vector<1x256xf32>
    %14 = arith.maximumf %12, %13 : vector<1x256xf32>
    %15 = arith.truncf %14 : vector<1x256xf32> to vector<1x256xbf16>
    %c0_12 = arith.constant 0 : index
    %c0_13 = arith.constant 0 : index
    %16 = vector.load %arg6[%c0_12, %c0_13] : memref<256x128xbf16, #tpu.memory_space<vmem>>, vector<256x128xbf16>
    %cst_14 = arith.constant dense<0.000000e+00> : vector<1x128xf32>
    %17 = tpu.matmul %15, %16, %cst_14 {dimension_numbers = #tpu.dot_dimension_numbers<[1], [0], [0], [1], [0, 0, 1, 1], [], []>} : vector<1x256xbf16>, vector<256x128xbf16>, vector<1x128xf32> -> vector<1x128xf32>
    %c0_15 = arith.constant 0 : index
    %c0_16 = arith.constant 0 : index
    %18 = vector.load %arg7[%c0_15, %c0_16] : memref<1x128xf32, #tpu.memory_space<vmem>>, vector<1x128xf32>
    %19 = arith.addf %17, %18 : vector<1x128xf32>
    %20 = arith.mulf %19, %19 : vector<1x128xf32>
    %c0_17 = arith.constant 0 : index
    %c0_18 = arith.constant 0 : index
    %21 = vector.load %arg8[%c0_17, %c0_18] : memref<128x128xf32, #tpu.memory_space<vmem>>, vector<128x128xf32>
    %cst_19 = arith.constant dense<0.000000e+00> : vector<1x128xf32>
    %22 = tpu.matmul %20, %21, %cst_19 {dimension_numbers = #tpu.dot_dimension_numbers<[1], [0], [0], [1], [0, 0, 1, 1], [], []>} : vector<1x128xf32>, vector<128x128xf32>, vector<1x128xf32> -> vector<1x128xf32>
    %cst_20 = arith.constant 1.000000e-24 : f32
    %23 = vector.broadcast %cst_20 : f32 to vector<1x128xf32>
    %24 = arith.maximumf %22, %23 : vector<1x128xf32>
    %25 = math.rsqrt %24 : vector<1x128xf32>
    %26 = arith.mulf %19, %25 : vector<1x128xf32>
    %c0_21 = arith.constant 0 : index
    %c0_22 = arith.constant 0 : index
    %27 = vector.load %arg9[%c0_21, %c0_22] : memref<1x128xf32, #tpu.memory_space<vmem>>, vector<1x128xf32>
    tpu.vector_store %arg9[%c0_21, %c0_22], %26 {strides = array<i32>} : memref<1x128xf32, #tpu.memory_space<vmem>>, vector<1x128xf32>,
    return
  }
  func.func @transform_0(%arg0: i32) -> (i32, i32) {
    %c0_i32 = arith.constant 0 : i32
    %c0_i32_0 = arith.constant 0 : i32
    return %arg0, %c0_i32 : i32, i32
  }
  func.func @transform_1(%arg0: i32) -> (i32, i32) {
    %c0_i32 = arith.constant 0 : i32
    %c0_i32_0 = arith.constant 0 : i32
    %c0_i32_1 = arith.constant 0 : i32
    return %c0_i32, %c0_i32_0 : i32, i32
  }
  func.func @transform_2(%arg0: i32) -> (i32, i32) {
    %c0_i32 = arith.constant 0 : i32
    %c0_i32_0 = arith.constant 0 : i32
    %c0_i32_1 = arith.constant 0 : i32
    return %c0_i32, %c0_i32_0 : i32, i32
  }
  func.func @transform_3(%arg0: i32) -> (i32, i32) {
    %c0_i32 = arith.constant 0 : i32
    %c0_i32_0 = arith.constant 0 : i32
    %c0_i32_1 = arith.constant 0 : i32
    return %c0_i32, %c0_i32_0 : i32, i32
  }
  func.func @transform_4(%arg0: i32) -> (i32, i32) {
    %c0_i32 = arith.constant 0 : i32
    %c0_i32_0 = arith.constant 0 : i32
    %c0_i32_1 = arith.constant 0 : i32
    return %c0_i32, %c0_i32_0 : i32, i32
  }
  func.func @transform_5(%arg0: i32) -> (i32, i32) {
    %c0_i32 = arith.constant 0 : i32
    %c0_i32_0 = arith.constant 0 : i32
    %c0_i32_1 = arith.constant 0 : i32
    return %c0_i32, %c0_i32_0 : i32, i32
  }
  func.func @transform_6(%arg0: i32) -> (i32, i32) {
    %c0_i32 = arith.constant 0 : i32
    %c0_i32_0 = arith.constant 0 : i32
    %c0_i32_1 = arith.constant 0 : i32
    return %c0_i32, %c0_i32_0 : i32, i32
  }
  func.func @transform_7(%arg0: i32) -> (i32, i32) {
    %c0_i32 = arith.constant 0 : i32
    %c0_i32_0 = arith.constant 0 : i32
    %c0_i32_1 = arith.constant 0 : i32
    return %c0_i32, %c0_i32_0 : i32, i32
  }
  func.func @transform_8(%arg0: i32) -> (i32, i32) {
    %c0_i32 = arith.constant 0 : i32
    %c0_i32_0 = arith.constant 0 : i32
    return %arg0, %c0_i32 : i32, i32
  }
}

</mosaic_0001>

<llo_original>
// kernel: tpu_custom_call.1
$region0: #{tpu_custom_call.1}
  #allocation0 [shape = 'u32[]', space=smem, size = 0x4, offset = 0x4, fixed_abs, tag = 'smem constant byte address 0x4 - core index']
  #allocation1 [shape = 'u32[144,128]{1,0:T(1,128)}', space=vmem, size = 0x12000, scoped, tag = 'internal scratch']
  %s0 = inlined_call_operand.hbm [shape: f32[1,256], index: 0, kind: input, shape index: {}]
  %s1 = inlined_call_operand.hbm [shape: bf16[256,256], index: 1, kind: input, shape index: {}]
  %s2 = inlined_call_operand.vmem [shape: f32[1,256], index: 2, kind: input, shape index: {}]
  %s3 = inlined_call_operand.hbm [shape: bf16[256,256], index: 3, kind: input, shape index: {}]
  %s4 = inlined_call_operand.vmem [shape: f32[1,256], index: 4, kind: input, shape index: {}]
  %s5 = inlined_call_operand.hbm [shape: bf16[256,128], index: 5, kind: input, shape index: {}]
  %s6 = inlined_call_operand.vmem [shape: f32[1,128], index: 6, kind: input, shape index: {}]
  %s7 = inlined_call_operand.hbm [shape: f32[128,128], index: 7, kind: input, shape index: {}]
  %s8 = inlined_call_operand.hbm [shape: f32[1,128], index: 8, kind: output, shape index: {}]
  %s9 = sld [smem:[#allocation0]]
  $region62: #{tpu_custom_call.1} parent=0
    _
  %s11 = ssub.s32 1, %s9
  %s12 = scalar_select 0, %s11, %s9
  $region1: #{tpu_custom_call.1} parent=0
    #allocation2 [shape = 'u8[1024]{0}', space=vmem, size = 0x400, scoped, tag = 'input window, operand 0, single buffered']
    #allocation3 [shape = 's32[1]{0}', space=sflag, size = 0x4, scoped, tag = 'scoped memory for tpu_custom_call.1']
    #allocation4 [shape = 's32[1]{0}', space=sflag, size = 0x4, scoped, tag = 'scoped memory for tpu_custom_call.1']
    #allocation5 [shape = 'u8[131072]{0}', space=vmem, size = 0x20000, scoped, tag = 'input window, operand 1, single buffered']
    #allocation6 [shape = 's32[1]{0}', space=sflag, size = 0x4, scoped, tag = 'scoped memory for tpu_custom_call.1']
    #allocation7 [shape = 'u8[131072]{0}', space=vmem, size = 0x20000, scoped, tag = 'input window, operand 3, single buffered']
    #allocation8 [shape = 'u8[65536]{0}', space=vmem, size = 0x10000, scoped, tag = 'input window, operand 5, single buffered']
    #allocation9 [shape = 's32[1]{0}', space=sflag, size = 0x4, scoped, tag = 'scoped memory for tpu_custom_call.1']
    #allocation10 [shape = 'u8[65536]{0}', space=vmem, size = 0x10000, scoped, tag = 'input window, operand 7, single buffered']
    #allocation11 [shape = 'u8[512]{0}', space=vmem, size = 0x400, scoped, tag = 'output window, operand 0, single buffered']
    %13 = vsyncpa [#allocation3], 0
    %14 = vsyncpa [#allocation6], 0
    %15 = vsyncpa [#allocation9], 0
    %16 = vsyncpa [#allocation4], 0
    // Predicated region
    $region2: #{tpu_custom_call.1} parent=1 // pred_check
      _
    $region3: #{tpu_custom_call.1} parent=1 // pred_check_branch
      %18 = sbr.rel (0) target = $region5
    $region4: #{tpu_custom_call.1} parent=1 // pred_region
      %s20 = ssub.s32 32, 32
      %21 = vsyncadd [#allocation3], %s20
      %s23 = sshll.u32 [#allocation2], 4
      %s24 = int_to_ptr.vmem [resolvable:$true] %s23
      %26 = dma.hbm_to_vmem [thread:$0]  %s0, 32, %s24, [#allocation3]
    $region5: #{tpu_custom_call.1} parent=1 // pred_fallthru
      _
    // Predicated region
    $region6: #{tpu_custom_call.1} parent=1 // pred_check
      _
    $region7: #{tpu_custom_call.1} parent=1 // pred_check_branch
      %28 = sbr.rel (0) target = $region9
    $region8: #{tpu_custom_call.1} parent=1 // pred_region
      %s30 = ssub.s32 4096, 4096
      %31 = vsyncadd [#allocation6], %s30
      %s32 = sshll.u32 [#allocation5], 4
      %s33 = int_to_ptr.vmem [resolvable:$true] %s32
      %38 = dma.hbm_to_vmem [thread:$0]  %s1, 4096, %s33, [#allocation6], 128, 128, 8
    $region9: #{tpu_custom_call.1} parent=1 // pred_fallthru
      _
    // Predicated region
    $region10: #{tpu_custom_call.1} parent=1 // pred_check
      _
    $region11: #{tpu_custom_call.1} parent=1 // pred_check_branch
      %40 = sbr.rel (0) target = $region13
    $region12: #{tpu_custom_call.1} parent=1 // pred_region
      _
    $region13: #{tpu_custom_call.1} parent=1 // pred_fallthru
      _
    // Predicated region
    $region14: #{tpu_custom_call.1} parent=1 // pred_check
      _
    $region15: #{tpu_custom_call.1} parent=1 // pred_check_branch
      %42 = sbr.rel (0) target = $region17
    $region16: #{tpu_custom_call.1} parent=1 // pred_region
      %s44 = ssub.s32 4096, 4096
      %45 = vsyncadd [#allocation6], %s44
      %s46 = sshll.u32 [#allocation7], 4
      %s47 = int_to_ptr.vmem [resolvable:$true] %s46
      %52 = dma.hbm_to_vmem [thread:$0]  %s3, 4096, %s47, [#allocation6], 128, 128, 8
    $region17: #{tpu_custom_call.1} parent=1 // pred_fallthru
      _
    // Predicated region
    $region18: #{tpu_custom_call.1} parent=1 // pred_check
      _
    $region19: #{tpu_custom_call.1} parent=1 // pred_check_branch
      %54 = sbr.rel (0) target = $region21
    $region20: #{tpu_custom_call.1} parent=1 // pred_region
      _
    $region21: #{tpu_custom_call.1} parent=1 // pred_fallthru
      _
    // Predicated region
    $region22: #{tpu_custom_call.1} parent=1 // pred_check
      _
    $region23: #{tpu_custom_call.1} parent=1 // pred_check_branch
      %56 = sbr.rel (0) target = $region25
    $region24: #{tpu_custom_call.1} parent=1 // pred_region
      %s58 = ssub.s32 2048, 2048
      %59 = vsyncadd [#allocation9], %s58
      %s60 = sshll.u32 [#allocation8], 4
      %s61 = int_to_ptr.vmem [resolvable:$true] %s60
      %66 = dma.hbm_to_vmem [thread:$0]  %s5, 2048, %s61, [#allocation9], 64, 64, 4
    $region25: #{tpu_custom_call.1} parent=1 // pred_fallthru
      _
    // Predicated region
    $region26: #{tpu_custom_call.1} parent=1 // pred_check
      _
    $region27: #{tpu_custom_call.1} parent=1 // pred_check_branch
      %68 = sbr.rel (0) target = $region29
    $region28: #{tpu_custom_call.1} parent=1 // pred_region
      _
    $region29: #{tpu_custom_call.1} parent=1 // pred_fallthru
      _
    // Predicated region
    $region30: #{tpu_custom_call.1} parent=1 // pred_check
      _
    $region31: #{tpu_custom_call.1} parent=1 // pred_check_branch
      %70 = sbr.rel (0) target = $region33
    $region32: #{tpu_custom_call.1} parent=1 // pred_region
      %s72 = ssub.s32 2048, 2048
      %73 = vsyncadd [#allocation9], %s72
      %s74 = sshll.u32 [#allocation10], 4
      %s75 = int_to_ptr.vmem [resolvable:$true] %s74
      %80 = dma.hbm_to_vmem [thread:$0]  %s7, 2048, %s75, [#allocation9], 128, 128, 8
    $region33: #{tpu_custom_call.1} parent=1 // pred_fallthru
      _
    // Predicated region
    $region34: #{tpu_custom_call.1} parent=1 // pred_check
      _
    $region35: #{tpu_custom_call.1} parent=1 // pred_check_branch
      %82 = sbr.rel (0) target = $region37
    $region36: #{tpu_custom_call.1} parent=1 // pred_region
      %83 = dma.done [#allocation3], 32
    $region37: #{tpu_custom_call.1} parent=1 // pred_fallthru
      _
    // Predicated region
    $region38: #{tpu_custom_call.1} parent=1 // pred_check
      _
    $region39: #{tpu_custom_call.1} parent=1 // pred_check_branch
      %85 = sbr.rel (0) target = $region41
    $region40: #{tpu_custom_call.1} parent=1 // pred_region
      %86 = dma.done [#allocation6], 4096
    $region41: #{tpu_custom_call.1} parent=1 // pred_fallthru
      _
    // Predicated region
    $region42: #{tpu_custom_call.1} parent=1 // pred_check
      _
    $region43: #{tpu_custom_call.1} parent=1 // pred_check_branch
      %88 = sbr.rel (0) target = $region45
    $region44: #{tpu_custom_call.1} parent=1 // pred_region
      %89 = dma.done [#allocation6], 4096
    $region45: #{tpu_custom_call.1} parent=1 // pred_fallthru
      _
    // Predicated region
    $region46: #{tpu_custom_call.1} parent=1 // pred_check
      _
    $region47: #{tpu_custom_call.1} parent=1 // pred_check_branch
      %91 = sbr.rel (0) target = $region49
    $region48: #{tpu_custom_call.1} parent=1 // pred_region
      %92 = dma.done [#allocation9], 2048
    $region49: #{tpu_custom_call.1} parent=1 // pred_fallthru
      _
    // Predicated region
    $region50: #{tpu_custom_call.1} parent=1 // pred_check
      _
    $region51: #{tpu_custom_call.1} parent=1 // pred_check_branch
      %94 = sbr.rel (0) target = $region53
    $region52: #{tpu_custom_call.1} parent=1 // pred_region
      %95 = dma.done [#allocation9], 2048
    $region53: #{tpu_custom_call.1} parent=1 // pred_fallthru
      _
    %v97 = vld [vmem:[#allocation2] sm:$0x3]
    %v99 = vlaneseq
    %v100 = vshrl.u32 %v99, 7
    %v101 = vsub.s32 0, %v100
    %v102 = vrot.slane %v97, %v101
    %v103 = vlaneseq
    %v104 = vshrl.u32 %v103, 7
    %v105 = vsub.s32 1, %v104
    %v106 = vrot.slane %v97, %v105
    %v109 = vpack.c.bf16 %v102, %v102
    %v110 = vpack.c.bf16 %v106, %v106
    %v111 = vld [vmem:[#allocation5] sm:$0xff]
    %v112 = vld [vmem:[#allocation5 + $0x8] sm:$0xff]
    %v113 = vld [vmem:[#allocation5 + $0x10] sm:$0xff]
    %v114 = vld [vmem:[#allocation5 + $0x18] sm:$0xff]
    %v115 = vld [vmem:[#allocation5 + $0x20] sm:$0xff]
    %v116 = vld [vmem:[#allocation5 + $0x28] sm:$0xff]
    %v117 = vld [vmem:[#allocation5 + $0x30] sm:$0xff]
    %v118 = vld [vmem:[#allocation5 + $0x38] sm:$0xff]
    %v119 = vld [vmem:[#allocation5 + $0x40] sm:$0xff]
    %v120 = vld [vmem:[#allocation5 + $0x48] sm:$0xff]
    %v121 = vld [vmem:[#allocation5 + $0x50] sm:$0xff]
    %v122 = vld [vmem:[#allocation5 + $0x58] sm:$0xff]
    %v123 = vld [vmem:[#allocation5 + $0x60] sm:$0xff]
    %v124 = vld [vmem:[#allocation5 + $0x68] sm:$0xff]
    %v125 = vld [vmem:[#allocation5 + $0x70] sm:$0xff]
    %v126 = vld [vmem:[#allocation5 + $0x78] sm:$0xff]
    %v127 = vld [vmem:[#allocation5 + $0x80] sm:$0xff]
    %v128 = vld [vmem:[#allocation5 + $0x88] sm:$0xff]
    %v129 = vld [vmem:[#allocation5 + $0x90] sm:$0xff]
    %v130 = vld [vmem:[#allocation5 + $0x98] sm:$0xff]
    %v131 = vld [vmem:[#allocation5 + $0xa0] sm:$0xff]
    %v132 = vld [vmem:[#allocation5 + $0xa8] sm:$0xff]
    %v133 = vld [vmem:[#allocation5 + $0xb0] sm:$0xff]
    %v134 = vld [vmem:[#allocation5 + $0xb8] sm:$0xff]
    %v135 = vld [vmem:[#allocation5 + $0xc0] sm:$0xff]
    %v136 = vld [vmem:[#allocation5 + $0xc8] sm:$0xff]
    %v137 = vld [vmem:[#allocation5 + $0xd0] sm:$0xff]
    %v138 = vld [vmem:[#allocation5 + $0xd8] sm:$0xff]
    %v139 = vld [vmem:[#allocation5 + $0xe0] sm:$0xff]
    %v140 = vld [vmem:[#allocation5 + $0xe8] sm:$0xff]
    %v141 = vld [vmem:[#allocation5 + $0xf0] sm:$0xff]
    %v142 = vld [vmem:[#allocation5 + $0xf8] sm:$0xff]
    %v143 = vld [vmem:[%s2] sm:$0x3]
    %v176 = vunpack.c.l.b16 %v111
    %v177 = vunpack.c.h.b16 %v111
    %v178 = vunpack.c.l.b16 %v112
    %v179 = vunpack.c.h.b16 %v112
    %v180 = vunpack.c.l.b16 %v113
    %v181 = vunpack.c.h.b16 %v113
    %v182 = vunpack.c.l.b16 %v114
    %v183 = vunpack.c.h.b16 %v114
    %v184 = vunpack.c.l.b16 %v115
    %v185 = vunpack.c.h.b16 %v115
    %v186 = vunpack.c.l.b16 %v116
    %v187 = vunpack.c.h.b16 %v116
    %v188 = vunpack.c.l.b16 %v117
    %v189 = vunpack.c.h.b16 %v117
    %v190 = vunpack.c.l.b16 %v118
    %v191 = vunpack.c.h.b16 %v118
    %v192 = vunpack.c.l.b16 %v119
    %v193 = vunpack.c.h.b16 %v119
    %v194 = vunpack.c.l.b16 %v120
    %v195 = vunpack.c.h.b16 %v120
    %v196 = vunpack.c.l.b16 %v121
    %v197 = vunpack.c.h.b16 %v121
    %v198 = vunpack.c.l.b16 %v122
    %v199 = vunpack.c.h.b16 %v122
    %v200 = vunpack.c.l.b16 %v123
    %v201 = vunpack.c.h.b16 %v123
    %v202 = vunpack.c.l.b16 %v124
    %v203 = vunpack.c.h.b16 %v124
    %v204 = vunpack.c.l.b16 %v125
    %v205 = vunpack.c.h.b16 %v125
    %v206 = vunpack.c.l.b16 %v126
    %v207 = vunpack.c.h.b16 %v126
    %v208 = vunpack.c.l.b16 %v127
    %v209 = vunpack.c.h.b16 %v127
    %v210 = vunpack.c.l.b16 %v128
    %v211 = vunpack.c.h.b16 %v128
    %v212 = vunpack.c.l.b16 %v129
    %v213 = vunpack.c.h.b16 %v129
    %v214 = vunpack.c.l.b16 %v130
    %v215 = vunpack.c.h.b16 %v130
    %v216 = vunpack.c.l.b16 %v131
    %v217 = vunpack.c.h.b16 %v131
    %v218 = vunpack.c.l.b16 %v132
    %v219 = vunpack.c.h.b16 %v132
    %v220 = vunpack.c.l.b16 %v133
    %v221 = vunpack.c.h.b16 %v133
    %v222 = vunpack.c.l.b16 %v134
    %v223 = vunpack.c.h.b16 %v134
    %v224 = vunpack.c.l.b16 %v135
    %v225 = vunpack.c.h.b16 %v135
    %v226 = vunpack.c.l.b16 %v136
    %v227 = vunpack.c.h.b16 %v136
    %v228 = vunpack.c.l.b16 %v137
    %v229 = vunpack.c.h.b16 %v137
    %v230 = vunpack.c.l.b16 %v138
    %v231 = vunpack.c.h.b16 %v138
    %v232 = vunpack.c.l.b16 %v139
    %v233 = vunpack.c.h.b16 %v139
    %v234 = vunpack.c.l.b16 %v140
    %v235 = vunpack.c.h.b16 %v140
    %v236 = vunpack.c.l.b16 %v141
    %v237 = vunpack.c.h.b16 %v141
    %v238 = vunpack.c.l.b16 %v142
    %v239 = vunpack.c.h.b16 %v142
    %v240 = vpack.c.b16 %v178, %v176
    %v241 = vpack.c.b16 %v179, %v177
    %v242 = vpack.c.b16 %v182, %v180
    %v243 = vpack.c.b16 %v183, %v181
    %v244 = vpack.c.b16 %v186, %v184
    %v245 = vpack.c.b16 %v187, %v185
    %v246 = vpack.c.b16 %v190, %v188
    %v247 = vpack.c.b16 %v191, %v189
    %v248 = vpack.c.b16 %v194, %v192
    %v249 = vpack.c.b16 %v195, %v193
    %v250 = vpack.c.b16 %v198, %v196
    %v251 = vpack.c.b16 %v199, %v197
    %v252 = vpack.c.b16 %v202, %v200
    %v253 = vpack.c.b16 %v203, %v201
    %v254 = vpack.c.b16 %v206, %v204
    %v255 = vpack.c.b16 %v207, %v205
    %v256 = vpack.c.b16 %v210, %v208
    %v257 = vpack.c.b16 %v211, %v209
    %v258 = vpack.c.b16 %v214, %v212
    %v259 = vpack.c.b16 %v215, %v213
    %v260 = vpack.c.b16 %v218, %v216
    %v261 = vpack.c.b16 %v219, %v217
    %v262 = vpack.c.b16 %v222, %v220
    %v263 = vpack.c.b16 %v223, %v221
    %v264 = vpack.c.b16 %v226, %v224
    %v265 = vpack.c.b16 %v227, %v225
    %v266 = vpack.c.b16 %v230, %v228
    %v267 = vpack.c.b16 %v231, %v229
    %v268 = vpack.c.b16 %v234, %v232
    %v269 = vpack.c.b16 %v235, %v233
    %v270 = vpack.c.b16 %v238, %v236
    %v271 = vpack.c.b16 %v239, %v237
    %v305 = vlaneseq
    %v306 = vshrl.u32 %v305, 7
    %v307 = vsub.s32 0, %v306
    %v308 = vrot.slane %v143, %v307
    %v309 = vlaneseq
    %v310 = vshrl.u32 %v309, 7
    %v311 = vsub.s32 1, %v310
    %v312 = vrot.slane %v143, %v311
    %315 = vmatprep.subr.bf16.mxu0 %v255
    %316 = vmatpush1.bf16.msra.mxu0 %v254
    %317 = vmatprep.subr.bf16.mxu0 %v253
    %318 = vmatpush1.bf16.msra.mxu0 %v252
    %319 = vmatprep.subr.bf16.mxu0 %v251
    %320 = vmatpush1.bf16.msra.mxu0 %v250
    %321 = vmatprep.subr.bf16.mxu0 %v249
    %322 = vmatpush1.bf16.msra.mxu0 %v248
    %323 = vmatprep.subr.bf16.mxu0 %v247
    %324 = vmatpush1.bf16.msra.mxu0 %v246
    %325 = vmatprep.subr.bf16.mxu0 %v245
    %326 = vmatpush1.bf16.msra.mxu0 %v244
    %327 = vmatprep.subr.bf16.mxu0 %v243
    %328 = vmatpush1.bf16.msra.mxu0 %v242
    %329 = vmatprep.subr.bf16.mxu0 %v241
    %330 = vmatpush1.bf16.msra.mxu0 %v240
    %331 = vmatprep.subr.bf16.mxu0 %v271
    %332 = vmatpush2.bf16.msra.mxu0 %v270
    %333 = vmatprep.subr.bf16.mxu0 %v269
    %334 = vmatpush2.bf16.msra.mxu0 %v268
    %335 = vmatprep.subr.bf16.mxu0 %v267
    %336 = vmatpush2.bf16.msra.mxu0 %v266
    %337 = vmatprep.subr.bf16.mxu0 %v265
    %338 = vmatpush2.bf16.msra.mxu0 %v264
    %339 = vmatprep.subr.bf16.mxu0 %v263
    %340 = vmatpush2.bf16.msra.mxu0 %v262
    %341 = vmatprep.subr.bf16.mxu0 %v261
    %342 = vmatpush2.bf16.msra.mxu0 %v260
    %343 = vmatprep.subr.bf16.mxu0 %v259
    %344 = vmatpush2.bf16.msra.mxu0 %v258
    %345 = vmatprep.subr.bf16.mxu0 %v257
    %346 = vmatpush2.bf16.msra.mxu0 %v256
    %347 = vmatprep.mubr.bf16.mxu0 %v110
    %348 = vmatmul.mubr.bf16.gmra.mxu0 %v109
    %v349 = vpop.f32.mrf.mxu0
    %v350 = vadd.f32 %v308, %v349
    %v351 = vpop.f32.mrf.mxu0
    %v352 = vadd.f32 %v312, %v351
    %v353 = vpop.f32.mrf.mxu0
    %v354 = vpop.f32.mrf.mxu0
    %355 = vdwg.mxu0
    %v356 = vmax.f32 %v350, 0.0
    %v357 = vmax.f32 %v352, 0.0
    %v358 = vpack.c.bf16 %v356, %v356
    %v359 = vpack.c.bf16 %v357, %v357
    %v360 = vld [vmem:[#allocation7] sm:$0xff]
    %v361 = vld [vmem:[#allocation7 + $0x8] sm:$0xff]
    %v362 = vld [vmem:[#allocation7 + $0x10] sm:$0xff]
    %v363 = vld [vmem:[#allocation7 + $0x18] sm:$0xff]
    %v364 = vld [vmem:[#allocation7 + $0x20] sm:$0xff]
    %v365 = vld [vmem:[#allocation7 + $0x28] sm:$0xff]
    %v366 = vld [vmem:[#allocation7 + $0x30] sm:$0xff]
    %v367 = vld [vmem:[#allocation7 + $0x38] sm:$0xff]
    %v368 = vld [vmem:[#allocation7 + $0x40] sm:$0xff]
    %v369 = vld [vmem:[#allocation7 + $0x48] sm:$0xff]
    %v370 = vld [vmem:[#allocation7 + $0x50] sm:$0xff]
    %v371 = vld [vmem:[#allocation7 + $0x58] sm:$0xff]
    %v372 = vld [vmem:[#allocation7 + $0x60] sm:$0xff]
    %v373 = vld [vmem:[#allocation7 + $0x68] sm:$0xff]
    %v374 = vld [vmem:[#allocation7 + $0x70] sm:$0xff]
    %v375 = vld [vmem:[#allocation7 + $0x78] sm:$0xff]
    %v376 = vld [vmem:[#allocation7 + $0x80] sm:$0xff]
    %v377 = vld [vmem:[#allocation7 + $0x88] sm:$0xff]
    %v378 = vld [vmem:[#allocation7 + $0x90] sm:$0xff]
    %v379 = vld [vmem:[#allocation7 + $0x98] sm:$0xff]
    %v380 = vld [vmem:[#allocation7 + $0xa0] sm:$0xff]
    %v381 = vld [vmem:[#allocation7 + $0xa8] sm:$0xff]
    %v382 = vld [vmem:[#allocation7 + $0xb0] sm:$0xff]
    %v383 = vld [vmem:[#allocation7 + $0xb8] sm:$0xff]
    %v384 = vld [vmem:[#allocation7 + $0xc0] sm:$0xff]
    %v385 = vld [vmem:[#allocation7 + $0xc8] sm:$0xff]
    %v386 = vld [vmem:[#allocation7 + $0xd0] sm:$0xff]
    %v387 = vld [vmem:[#allocation7 + $0xd8] sm:$0xff]
    %v388 = vld [vmem:[#allocation7 + $0xe0] sm:$0xff]
    %v389 = vld [vmem:[#allocation7 + $0xe8] sm:$0xff]
    %v390 = vld [vmem:[#allocation7 + $0xf0] sm:$0xff]
    %v391 = vld [vmem:[#allocation7 + $0xf8] sm:$0xff]
    %v392 = vld [vmem:[%s4] sm:$0x3]
    %v425 = vunpack.c.l.b16 %v360
    %v426 = vunpack.c.h.b16 %v360
    %v427 = vunpack.c.l.b16 %v361
    %v428 = vunpack.c.h.b16 %v361
    %v429 = vunpack.c.l.b16 %v362
    %v430 = vunpack.c.h.b16 %v362
    %v431 = vunpack.c.l.b16 %v363
    %v432 = vunpack.c.h.b16 %v363
    %v433 = vunpack.c.l.b16 %v364
    %v434 = vunpack.c.h.b16 %v364
    %v435 = vunpack.c.l.b16 %v365
    %v436 = vunpack.c.h.b16 %v365
    %v437 = vunpack.c.l.b16 %v366
    %v438 = vunpack.c.h.b16 %v366
    %v439 = vunpack.c.l.b16 %v367
    %v440 = vunpack.c.h.b16 %v367
    %v441 = vunpack.c.l.b16 %v368
    %v442 = vunpack.c.h.b16 %v368
    %v443 = vunpack.c.l.b16 %v369
    %v444 = vunpack.c.h.b16 %v369
    %v445 = vunpack.c.l.b16 %v370
    %v446 = vunpack.c.h.b16 %v370
    %v447 = vunpack.c.l.b16 %v371
    %v448 = vunpack.c.h.b16 %v371
    %v449 = vunpack.c.l.b16 %v372
    %v450 = vunpack.c.h.b16 %v372
    %v451 = vunpack.c.l.b16 %v373
    %v452 = vunpack.c.h.b16 %v373
    %v453 = vunpack.c.l.b16 %v374
    %v454 = vunpack.c.h.b16 %v374
    %v455 = vunpack.c.l.b16 %v375
    %v456 = vunpack.c.h.b16 %v375
    %v457 = vunpack.c.l.b16 %v376
    %v458 = vunpack.c.h.b16 %v376
    %v459 = vunpack.c.l.b16 %v377
    %v460 = vunpack.c.h.b16 %v377
    %v461 = vunpack.c.l.b16 %v378
    %v462 = vunpack.c.h.b16 %v378
    %v463 = vunpack.c.l.b16 %v379
    %v464 = vunpack.c.h.b16 %v379
    %v465 = vunpack.c.l.b16 %v380
    %v466 = vunpack.c.h.b16 %v380
    %v467 = vunpack.c.l.b16 %v381
    %v468 = vunpack.c.h.b16 %v381
    %v469 = vunpack.c.l.b16 %v382
    %v470 = vunpack.c.h.b16 %v382
    %v471 = vunpack.c.l.b16 %v383
    %v472 = vunpack.c.h.b16 %v383
    %v473 = vunpack.c.l.b16 %v384
    %v474 = vunpack.c.h.b16 %v384
    %v475 = vunpack.c.l.b16 %v385
    %v476 = vunpack.c.h.b16 %v385
    %v477 = vunpack.c.l.b16 %v386
    %v478 = vunpack.c.h.b16 %v386
    %v479 = vunpack.c.l.b16 %v387
    %v480 = vunpack.c.h.b16 %v387
    %v481 = vunpack.c.l.b16 %v388
    %v482 = vunpack.c.h.b16 %v388
    %v483 = vunpack.c.l.b16 %v389
    %v484 = vunpack.c.h.b16 %v389
    %v485 = vunpack.c.l.b16 %v390
    %v486 = vunpack.c.h.b16 %v390
    %v487 = vunpack.c.l.b16 %v391
    %v488 = vunpack.c.h.b16 %v391
    %v489 = vpack.c.b16 %v427, %v425
    %v490 = vpack.c.b16 %v428, %v426
    %v491 = vpack.c.b16 %v431, %v429
    %v492 = vpack.c.b16 %v432, %v430
    %v493 = vpack.c.b16 %v435, %v433
    %v494 = vpack.c.b16 %v436, %v434
    %v495 = vpack.c.b16 %v439, %v437
    %v496 = vpack.c.b16 %v440, %v438
    %v497 = vpack.c.b16 %v443, %v441
    %v498 = vpack.c.b16 %v444, %v442
    %v499 = vpack.c.b16 %v447, %v445
    %v500 = vpack.c.b16 %v448, %v446
    %v501 = vpack.c.b16 %v451, %v449
    %v502 = vpack.c.b16 %v452, %v450
    %v503 = vpack.c.b16 %v455, %v453
    %v504 = vpack.c.b16 %v456, %v454
    %v505 = vpack.c.b16 %v459, %v457
    %v506 = vpack.c.b16 %v460, %v458
    %v507 = vpack.c.b16 %v463, %v461
    %v508 = vpack.c.b16 %v464, %v462
    %v509 = vpack.c.b16 %v467, %v465
    %v510 = vpack.c.b16 %v468, %v466
    %v511 = vpack.c.b16 %v471, %v469
    %v512 = vpack.c.b16 %v472, %v470
    %v513 = vpack.c.b16 %v475, %v473
    %v514 = vpack.c.b16 %v476, %v474
    %v515 = vpack.c.b16 %v479, %v477
    %v516 = vpack.c.b16 %v480, %v478
    %v517 = vpack.c.b16 %v483, %v481
    %v518 = vpack.c.b16 %v484, %v482
    %v519 = vpack.c.b16 %v487, %v485
    %v520 = vpack.c.b16 %v488, %v486
    %v554 = vlaneseq
    %v555 = vshrl.u32 %v554, 7
    %v556 = vsub.s32 0, %v555
    %v557 = vrot.slane %v392, %v556
    %v558 = vlaneseq
    %v559 = vshrl.u32 %v558, 7
    %v560 = vsub.s32 1, %v559
    %v561 = vrot.slane %v392, %v560
    %564 = vmatprep.subr.bf16.mxu0 %v504
    %565 = vmatpush1.bf16.msra.mxu0 %v503
    %566 = vmatprep.subr.bf16.mxu0 %v502
    %567 = vmatpush1.bf16.msra.mxu0 %v501
    %568 = vmatprep.subr.bf16.mxu0 %v500
    %569 = vmatpush1.bf16.msra.mxu0 %v499
    %570 = vmatprep.subr.bf16.mxu0 %v498
    %571 = vmatpush1.bf16.msra.mxu0 %v497
    %572 = vmatprep.subr.bf16.mxu0 %v496
    %573 = vmatpush1.bf16.msra.mxu0 %v495
    %574 = vmatprep.subr.bf16.mxu0 %v494
    %575 = vmatpush1.bf16.msra.mxu0 %v493
    %576 = vmatprep.subr.bf16.mxu0 %v492
    %577 = vmatpush1.bf16.msra.mxu0 %v491
    %578 = vmatprep.subr.bf16.mxu0 %v490
    %579 = vmatpush1.bf16.msra.mxu0 %v489
    %580 = vmatprep.subr.bf16.mxu0 %v520
    %581 = vmatpush2.bf16.msra.mxu0 %v519
    %582 = vmatprep.subr.bf16.mxu0 %v518
    %583 = vmatpush2.bf16.msra.mxu0 %v517
    %584 = vmatprep.subr.bf16.mxu0 %v516
    %585 = vmatpush2.bf16.msra.mxu0 %v515
    %586 = vmatprep.subr.bf16.mxu0 %v514
    %587 = vmatpush2.bf16.msra.mxu0 %v513
    %588 = vmatprep.subr.bf16.mxu0 %v512
    %589 = vmatpush2.bf16.msra.mxu0 %v511
    %590 = vmatprep.subr.bf16.mxu0 %v510
    %591 = vmatpush2.bf16.msra.mxu0 %v509
    %592 = vmatprep.subr.bf16.mxu0 %v508
    %593 = vmatpush2.bf16.msra.mxu0 %v507
    %594 = vmatprep.subr.bf16.mxu0 %v506
    %595 = vmatpush2.bf16.msra.mxu0 %v505
    %596 = vmatprep.mubr.bf16.mxu0 %v359
    %597 = vmatmul.mubr.bf16.gmra.mxu0 %v358
    %v598 = vpop.f32.mrf.mxu0
    %v599 = vadd.f32 %v557, %v598
    %v600 = vpop.f32.mrf.mxu0
    %v601 = vadd.f32 %v561, %v600
    %v602 = vpop.f32.mrf.mxu0
    %v603 = vpop.f32.mrf.mxu0
    %604 = vdwg.mxu0
    %v605 = vmax.f32 %v599, 0.0
    %v606 = vmax.f32 %v601, 0.0
    %v607 = vpack.c.bf16 %v605, %v605
    %v608 = vpack.c.bf16 %v606, %v606
    %v609 = vld [vmem:[#allocation8] sm:$0xf]
    %v610 = vld [vmem:[#allocation8 + $0x4] sm:$0xf]
    %v611 = vld [vmem:[#allocation8 + $0x8] sm:$0xf]
    %v612 = vld [vmem:[#allocation8 + $0xc] sm:$0xf]
    %v613 = vld [vmem:[#allocation8 + $0x10] sm:$0xf]
    %v614 = vld [vmem:[#allocation8 + $0x14] sm:$0xf]
    %v615 = vld [vmem:[#allocation8 + $0x18] sm:$0xf]
    %v616 = vld [vmem:[#allocation8 + $0x1c] sm:$0xf]
    %v617 = vld [vmem:[#allocation8 + $0x20] sm:$0xf]
    %v618 = vld [vmem:[#allocation8 + $0x24] sm:$0xf]
    %v619 = vld [vmem:[#allocation8 + $0x28] sm:$0xf]
    %v620 = vld [vmem:[#allocation8 + $0x2c] sm:$0xf]
    %v621 = vld [vmem:[#allocation8 + $0x30] sm:$0xf]
    %v622 = vld [vmem:[#allocation8 + $0x34] sm:$0xf]
    %v623 = vld [vmem:[#allocation8 + $0x38] sm:$0xf]
    %v624 = vld [vmem:[#allocation8 + $0x3c] sm:$0xf]
    %v625 = vld [vmem:[#allocation8 + $0x40] sm:$0xf]
    %v626 = vld [vmem:[#allocation8 + $0x44] sm:$0xf]
    %v627 = vld [vmem:[#allocation8 + $0x48] sm:$0xf]
    %v628 = vld [vmem:[#allocation8 + $0x4c] sm:$0xf]
    %v629 = vld [vmem:[#allocation8 + $0x50] sm:$0xf]
    %v630 = vld [vmem:[#allocation8 + $0x54] sm:$0xf]
    %v631 = vld [vmem:[#allocation8 + $0x58] sm:$0xf]
    %v632 = vld [vmem:[#allocation8 + $0x5c] sm:$0xf]
    %v633 = vld [vmem:[#allocation8 + $0x60] sm:$0xf]
    %v634 = vld [vmem:[#allocation8 + $0x64] sm:$0xf]
    %v635 = vld [vmem:[#allocation8 + $0x68] sm:$0xf]
    %v636 = vld [vmem:[#allocation8 + $0x6c] sm:$0xf]
    %v637 = vld [vmem:[#allocation8 + $0x70] sm:$0xf]
    %v638 = vld [vmem:[#allocation8 + $0x74] sm:$0xf]
    %v639 = vld [vmem:[#allocation8 + $0x78] sm:$0xf]
    %v640 = vld [vmem:[#allocation8 + $0x7c] sm:$0xf]
    %v641 = vld [vmem:[%s6] sm:$0x1]
    %v674 = vunpack.c.l.b16 %v609
    %v675 = vunpack.c.l.b16 %v610
    %v676 = vunpack.c.l.b16 %v611
    %v677 = vunpack.c.l.b16 %v612
    %v678 = vunpack.c.l.b16 %v613
    %v679 = vunpack.c.l.b16 %v614
    %v680 = vunpack.c.l.b16 %v615
    %v681 = vunpack.c.l.b16 %v616
    %v682 = vunpack.c.l.b16 %v617
    %v683 = vunpack.c.l.b16 %v618
    %v684 = vunpack.c.l.b16 %v619
    %v685 = vunpack.c.l.b16 %v620
    %v686 = vunpack.c.l.b16 %v621
    %v687 = vunpack.c.l.b16 %v622
    %v688 = vunpack.c.l.b16 %v623
    %v689 = vunpack.c.l.b16 %v624
    %v690 = vunpack.c.l.b16 %v625
    %v691 = vunpack.c.l.b16 %v626
    %v692 = vunpack.c.l.b16 %v627
    %v693 = vunpack.c.l.b16 %v628
    %v694 = vunpack.c.l.b16 %v629
    %v695 = vunpack.c.l.b16 %v630
    %v696 = vunpack.c.l.b16 %v631
    %v697 = vunpack.c.l.b16 %v632
    %v698 = vunpack.c.l.b16 %v633
    %v699 = vunpack.c.l.b16 %v634
    %v700 = vunpack.c.l.b16 %v635
    %v701 = vunpack.c.l.b16 %v636
    %v702 = vunpack.c.l.b16 %v637
    %v703 = vunpack.c.l.b16 %v638
    %v704 = vunpack.c.l.b16 %v639
    %v705 = vunpack.c.l.b16 %v640
    %v706 = vpack.c.b16 %v675, %v674
    %v707 = vpack.c.b16 %v677, %v676
    %v708 = vpack.c.b16 %v679, %v678
    %v709 = vpack.c.b16 %v681, %v680
    %v710 = vpack.c.b16 %v683, %v682
    %v711 = vpack.c.b16 %v685, %v684
    %v712 = vpack.c.b16 %v687, %v686
    %v713 = vpack.c.b16 %v689, %v688
    %v714 = vpack.c.b16 %v691, %v690
    %v715 = vpack.c.b16 %v693, %v692
    %v716 = vpack.c.b16 %v695, %v694
    %v717 = vpack.c.b16 %v697, %v696
    %v718 = vpack.c.b16 %v699, %v698
    %v719 = vpack.c.b16 %v701, %v700
    %v720 = vpack.c.b16 %v703, %v702
    %v721 = vpack.c.b16 %v705, %v704
    %738 = vmatprep.subr.bf16.mxu0 0
    %739 = vmatpush1.bf16.msra.mxu0 %v713
    %740 = vmatprep.subr.bf16.mxu0 0
    %741 = vmatpush1.bf16.msra.mxu0 %v712
    %742 = vmatprep.subr.bf16.mxu0 0
    %743 = vmatpush1.bf16.msra.mxu0 %v711
    %744 = vmatprep.subr.bf16.mxu0 0
    %745 = vmatpush1.bf16.msra.mxu0 %v710
    %746 = vmatprep.subr.bf16.mxu0 0
    %747 = vmatpush1.bf16.msra.mxu0 %v709
    %748 = vmatprep.subr.bf16.mxu0 0
    %749 = vmatpush1.bf16.msra.mxu0 %v708
    %750 = vmatprep.subr.bf16.mxu0 0
    %751 = vmatpush1.bf16.msra.mxu0 %v707
    %752 = vmatprep.subr.bf16.mxu0 0
    %753 = vmatpush1.bf16.msra.mxu0 %v706
    %754 = vmatprep.subr.bf16.mxu0 0
    %755 = vmatpush2.bf16.msra.mxu0 %v721
    %756 = vmatprep.subr.bf16.mxu0 0
    %757 = vmatpush2.bf16.msra.mxu0 %v720
    %758 = vmatprep.subr.bf16.mxu0 0
    %759 = vmatpush2.bf16.msra.mxu0 %v719
    %760 = vmatprep.subr.bf16.mxu0 0
    %761 = vmatpush2.bf16.msra.mxu0 %v718
    %762 = vmatprep.subr.bf16.mxu0 0
    %763 = vmatpush2.bf16.msra.mxu0 %v717
    %764 = vmatprep.subr.bf16.mxu0 0
    %765 = vmatpush2.bf16.msra.mxu0 %v716
    %766 = vmatprep.subr.bf16.mxu0 0
    %767 = vmatpush2.bf16.msra.mxu0 %v715
    %768 = vmatprep.subr.bf16.mxu0 0
    %769 = vmatpush2.bf16.msra.mxu0 %v714
    %770 = vmatprep.mubr.bf16.mxu0 %v608
    %771 = vmatmul.mubr.bf16.gmra.mxu0 %v607
    %v772 = vpop.f32.mrf.mxu0
    %v773 = vadd.f32 %v641, %v772
    %v774 = vpop.f32.mrf.mxu0
    %v775 = vpop.f32.mrf.mxu0
    %v776 = vpop.f32.mrf.mxu0
    %777 = vdwg.mxu0
    %v778 = vmul.f32 %v773, %v773
    %v779 = vld [vmem:[#allocation10] sm:$0xff]
    %v780 = vld [vmem:[#allocation10 + $0x8] sm:$0xff]
    %v781 = vld [vmem:[#allocation10 + $0x10] sm:$0xff]
    %v782 = vld [vmem:[#allocation10 + $0x18] sm:$0xff]
    %v783 = vld [vmem:[#allocation10 + $0x20] sm:$0xff]
    %v784 = vld [vmem:[#allocation10 + $0x28] sm:$0xff]
    %v785 = vld [vmem:[#allocation10 + $0x30] sm:$0xff]
    %v786 = vld [vmem:[#allocation10 + $0x38] sm:$0xff]
    %v787 = vld [vmem:[#allocation10 + $0x40] sm:$0xff]
    %v788 = vld [vmem:[#allocation10 + $0x48] sm:$0xff]
    %v789 = vld [vmem:[#allocation10 + $0x50] sm:$0xff]
    %v790 = vld [vmem:[#allocation10 + $0x58] sm:$0xff]
    %v791 = vld [vmem:[#allocation10 + $0x60] sm:$0xff]
    %v792 = vld [vmem:[#allocation10 + $0x68] sm:$0xff]
    %v793 = vld [vmem:[#allocation10 + $0x70] sm:$0xff]
    %v794 = vld [vmem:[#allocation10 + $0x78] sm:$0xff]
    %795 = vmatprep.subr.mxu0 0.0
    %796 = vmatpush1.msra.mxu0 %v794
    %797 = vmatprep.subr.mxu0 0.0
    %798 = vmatpush1.msra.mxu0 %v793
    %799 = vmatprep.subr.mxu0 0.0
    %800 = vmatpush1.msra.mxu0 %v792
    %801 = vmatprep.subr.mxu0 0.0
    %802 = vmatpush1.msra.mxu0 %v791
    %803 = vmatprep.subr.mxu0 0.0
    %804 = vmatpush1.msra.mxu0 %v790
    %805 = vmatprep.subr.mxu0 0.0
    %806 = vmatpush1.msra.mxu0 %v789
    %807 = vmatprep.subr.mxu0 0.0
    %808 = vmatpush1.msra.mxu0 %v788
    %809 = vmatprep.subr.mxu0 0.0
    %810 = vmatpush1.msra.mxu0 %v787
    %811 = vmatprep.subr.mxu0 0.0
    %812 = vmatpush1.msra.mxu0 %v786
    %813 = vmatprep.subr.mxu0 0.0
    %814 = vmatpush1.msra.mxu0 %v785
    %815 = vmatprep.subr.mxu0 0.0
    %816 = vmatpush1.msra.mxu0 %v784
    %817 = vmatprep.subr.mxu0 0.0
    %818 = vmatpush1.msra.mxu0 %v783
    %819 = vmatprep.subr.mxu0 0.0
    %820 = vmatpush1.msra.mxu0 %v782
    %821 = vmatprep.subr.mxu0 0.0
    %822 = vmatpush1.msra.mxu0 %v781
    %823 = vmatprep.subr.mxu0 0.0
    %824 = vmatpush1.msra.mxu0 %v780
    %825 = vmatprep.subr.mxu0 0.0
    %826 = vmatpush1.msra.mxu0 %v779
    %827 = vmatprep.subr.mxu0 0.0
    %828 = vmatpush2.msra.mxu0 0.0
    %829 = vmatprep.subr.mxu0 0.0
    %830 = vmatpush2.msra.mxu0 0.0
    %831 = vmatprep.subr.mxu0 0.0
    %832 = vmatpush2.msra.mxu0 0.0
    %833 = vmatprep.subr.mxu0 0.0
    %834 = vmatpush2.msra.mxu0 0.0
    %835 = vmatprep.subr.mxu0 0.0
    %836 = vmatpush2.msra.mxu0 0.0
    %837 = vmatprep.subr.mxu0 0.0
    %838 = vmatpush2.msra.mxu0 0.0
    %839 = vmatprep.subr.mxu0 0.0
    %840 = vmatpush2.msra.mxu0 0.0
    %841 = vmatprep.subr.mxu0 0.0
    %842 = vmatpush2.msra.mxu0 0.0
    %843 = vmatprep.subr.mxu0 0.0
    %844 = vmatpush2.msra.mxu0 0.0
    %845 = vmatprep.subr.mxu0 0.0
    %846 = vmatpush2.msra.mxu0 0.0
    %847 = vmatprep.subr.mxu0 0.0
    %848 = vmatpush2.msra.mxu0 0.0
    %849 = vmatprep.subr.mxu0 0.0
    %850 = vmatpush2.msra.mxu0 0.0
    %851 = vmatprep.subr.mxu0 0.0
    %852 = vmatpush2.msra.mxu0 0.0
    %853 = vmatprep.subr.mxu0 0.0
    %854 = vmatpush2.msra.mxu0 0.0
    %855 = vmatprep.subr.mxu0 0.0
    %856 = vmatpush2.msra.mxu0 0.0
    %857 = vmatprep.subr.mxu0 0.0
    %858 = vmatpush2.msra.mxu0 0.0
    %859 = vmatprep.mubr.f32.mxu0 0.0
    %860 = vmatmul.mubr.f32.gmra.mxu0 %v778
    %v861 = vpop.f32.mrf.mxu0
    %v862 = vadd.f32 0.0, %v861
    %v863 = vpop.f32.mrf.mxu0
    %864 = vdwg.mxu0
    %v865 = vmax.f32 %v862, 1e-24
    %v866 = vrsqrt.pop %v865
    %v867 = vmul.f32 %v773, %v866
    %868 = vst [vmem:[#allocation11] sm:$0x1] %v867
    // Predicated region
    $region54: #{tpu_custom_call.1} parent=1 // pred_check
      _
    $region55: #{tpu_custom_call.1} parent=1 // pred_check_branch
      %870 = sbr.rel (0) target = $region57
    $region56: #{tpu_custom_call.1} parent=1 // pred_region
      %s872 = ssub.s32 16, 16
      %873 = vsyncadd [#allocation4], %s872
      %s875 = sshll.u32 [#allocation11], 4
      %s876 = int_to_ptr.vmem [resolvable:$true] %s875
      %878 = dma.vmem_to_hbm [thread:$0]  %s876, 16, %s8, [#allocation4]
    $region57: #{tpu_custom_call.1} parent=1 // pred_fallthru
      _
    // Predicated region
    $region58: #{tpu_custom_call.1} parent=1 // pred_check
      _
    $region59: #{tpu_custom_call.1} parent=1 // pred_check_branch
      %880 = sbr.rel (0) target = $region61
    $region60: #{tpu_custom_call.1} parent=1 // pred_region
      %881 = dma.done [#allocation4], 16
    $region61: #{tpu_custom_call.1} parent=1 // pred_fallthru
      _
    %882 = vsyncpa [#allocation3], 1
    %883 = vsyncpa [#allocation6], 1
    %884 = vsyncpa [#allocation9], 1
    %885 = vsyncpa [#allocation4], 1

</llo_original>
